<compile_context>
chip_gen: v5e
topology: v5e:2x2
jax: 0.10.0
libtpu: 0.0.40
codegen_flags: <defaults>
</compile_context>

<pallas_src>
import jax
import jax.numpy as jnp
from jax.experimental import pallas as pl
from jax.experimental.pallas import tpu as pltpu


def _round_up(x, m):
    return ((x + m - 1) // m) * m


def _choose_tiles(nc, hw, dtype_bytes=4, max_block_bytes=1 << 20):
    """Lane/sublane-dense tiles: THW multiple of 128, TR multiple of 8, ~<=1 MiB.

    Keeps the double-buffered working set (in+out) well under the scoped VMEM
    defaults (16 MiB v5e, 32 MiB v6e/v7x) and v7x's 64 MiB physical VMEM.
    """
    thw = min(_round_up(hw, 128), 2048)
    max_rows = max(8, ((max_block_bytes // (thw * dtype_bytes)) // 8) * 8)
    tr = min(_round_up(nc, 8), max_rows)
    return tr, thw


# ---------------- pass 1: per-row (n*c) sum / sum-of-squares over HW ----------------
def _stats_kernel(x_ref, sum_ref, sq_ref, acc_s, acc_q):
    h = pl.program_id(1)

    @pl.when(h == 0)
    def _():
        acc_s[...] = jnp.zeros_like(acc_s)
        acc_q[...] = jnp.zeros_like(acc_q)

    x = x_ref[...].astype(jnp.float32)                       # (TR, THW)
    acc_s[...] += jnp.sum(x, axis=1, keepdims=True)
    acc_q[...] += jnp.sum(x * x, axis=1, keepdims=True)

    @pl.when(h == pl.num_programs(1) - 1)
    def _():
        sum_ref[...] = acc_s[...]
        sq_ref[...] = acc_q[...]


def _row_stats(x2p, tr, thw):
    nc_p, hw_p = x2p.shape
    grid = (nc_p // tr, hw_p // thw)
    return pl.pallas_call(
        _stats_kernel,
        out_shape=(jax.ShapeDtypeStruct((nc_p, 1), jnp.float32),
                   jax.ShapeDtypeStruct((nc_p, 1), jnp.float32)),
        grid=grid,
        in_specs=[pl.BlockSpec((tr, thw), lambda r, h: (r, h))],
        out_specs=(pl.BlockSpec((tr, 1), lambda r, h: (r, 0)),
                   pl.BlockSpec((tr, 1), lambda r, h: (r, 0))),
        scratch_shapes=[pltpu.VMEM((tr, 1), jnp.float32),
                        pltpu.VMEM((tr, 1), jnp.float32)],
        compiler_params=pltpu.CompilerParams(
            dimension_semantics=("parallel", "arbitrary")),
        cost_estimate=pl.CostEstimate(
            flops=3 * nc_p * hw_p,
            transcendentals=0,
            bytes_accessed=nc_p * hw_p * x2p.dtype.itemsize + 8 * nc_p),
    )(x2p)


# ---------------- pass 2: pure-VPU elementwise out = a * x + b ----------------
def _apply_kernel(a_ref, b_ref, x_ref, o_ref):
    o_ref[...] = (a_ref[...] * x_ref[...].astype(jnp.float32)
                  + b_ref[...]).astype(o_ref.dtype)


def _apply(a_p, b_p, x2p, tr, thw, out_dtype):
    nc_p, hw_p = x2p.shape
    grid = (nc_p // tr, hw_p // thw)
    itemsize = x2p.dtype.itemsize + jnp.dtype(out_dtype).itemsize
    return pl.pallas_call(
        _apply_kernel,
        out_shape=jax.ShapeDtypeStruct((nc_p, hw_p), out_dtype),
        grid=grid,
        in_specs=[pl.BlockSpec((tr, 1), lambda r, h: (r, 0)),
                  pl.BlockSpec((tr, 1), lambda r, h: (r, 0)),
                  pl.BlockSpec((tr, thw), lambda r, h: (r, h))],
        out_specs=pl.BlockSpec((tr, thw), lambda r, h: (r, h)),
        compiler_params=pltpu.CompilerParams(
            dimension_semantics=("parallel", "parallel")),
        cost_estimate=pl.CostEstimate(
            flops=2 * nc_p * hw_p,
            transcendentals=0,
            bytes_accessed=itemsize * nc_p * hw_p + 8 * nc_p),
    )(a_p, b_p, x2p)


# ---------------- wrapper ----------------
def _spectral_normalize(w, n_iter=30):
    """Forward-time weight reparameterization of torch spectral_norm (power iteration)."""
    # TODO(synk): torch persists the power-iteration vector across steps; here we
    # run a converged power iteration on the fly (same forward semantics).
    v = jnp.full((w.shape[1],), 1.0 / jnp.sqrt(float(w.shape[1])), w.dtype)
    u = w @ v
    for _ in range(n_iter):
        u = w @ v
        u = u / (jnp.linalg.norm(u) + 1e-12)
        v = w.T @ u
        v = v / (jnp.linalg.norm(v) + 1e-12)
    sigma = u @ (w @ v)
    return w / sigma


def ada_data_norm(x, mean_p, std_p, w_scale, b_scale, w_bias, b_bias):
    """AdaDataNorm forward.

    x: (N, C, H, W); mean_p/std_p: learned params (1, C, 1);
    w_scale/w_bias: PyTorch-layout Linear weights (C, 2C); b_scale/b_bias: (C,).
    """
    N, C, H, W = x.shape
    HW, NC = H * W, N * C
    x2 = x.reshape(NC, HW)

    tr, thw = _choose_tiles(NC, HW, dtype_bytes=x.dtype.itemsize)
    nc_p, hw_p = _round_up(NC, tr), _round_up(HW, thw)
    x2p = jnp.pad(x2, ((0, nc_p - NC), (0, hw_p - HW)))      # zero pad: safe for sums

    # pass 1 (Pallas): row sums / sums of squares
    s, q = _row_stats(x2p, tr, thw)
    s = s[:NC, 0].reshape(N, C)
    q = q[:NC, 0].reshape(N, C)
    mean = s / HW
    var = (q - HW * mean * mean) / (HW - 1)                  # unbiased, as torch.std
    std = jnp.sqrt(jnp.maximum(var, 0.0))

    # tiny projections hoisted to XLA (perf review): scale/bias from the stats
    feats = jnp.concatenate([mean, std], axis=1)             # (N, 2C)
    ws = _spectral_normalize(w_scale)
    wb = _spectral_normalize(w_bias)
    scale = feats @ ws.T + b_scale                           # multiplies normed
    bias = feats @ wb.T + b_bias                             # added

    # fold learned (1, C, 1) data-norm params into one per-row affine: out = a*x + b
    mp = mean_p.reshape(1, C)
    sp = std_p.reshape(1, C)
    a = (scale / sp).astype(jnp.float32)
    b = (bias - scale * mp / sp).astype(jnp.float32)
    a_p = jnp.pad(a.reshape(NC, 1), ((0, nc_p - NC), (0, 0)))
    b_p = jnp.pad(b.reshape(NC, 1), ((0, nc_p - NC), (0, 0)))

    # pass 2 (Pallas): fused elementwise apply on lane/sublane-dense tiles
    out_p = _apply(a_p, b_p, x2p, tr, thw, x.dtype)
    return out_p[:NC, :HW].reshape(N, C, H, W)


if __name__ == "__main__":
    # Small shapes consistent with the module: in_size = C = 4.
    N, C, H, W = 2, 4, 16, 16
    key = jax.random.PRNGKey(0)
    kx, km, ks, kws, kbs, kwb, kbb = jax.random.split(key, 7)

    x = jax.random.normal(kx, (N, C, H, W), jnp.float32)
    # The module zero-inits mean/std (which would divide by zero); use nonzero
    # values so the math is well defined while keeping identical semantics.
    mean_p = 0.1 * jax.random.normal(km, (1, C, 1), jnp.float32)
    std_p = jax.random.uniform(ks, (1, C, 1), jnp.float32, 0.5, 1.5)

    bound = 1.0 / (2 * C) ** 0.5                             # PyTorch Linear init bound
    w_scale = jax.random.uniform(kws, (C, 2 * C), jnp.float32, -bound, bound)
    b_scale = jax.random.uniform(kbs, (C,), jnp.float32, -bound, bound)
    w_bias = jax.random.uniform(kwb, (C, 2 * C), jnp.float32, -bound, bound)
    b_bias = jax.random.uniform(kbb, (C,), jnp.float32, -bound, bound)

    out = jax.block_until_ready(
        ada_data_norm(x, mean_p, std_p, w_scale, b_scale, w_bias, b_bias))

    # Pure-JAX reference with identical semantics to the PyTorch module.
    x2 = x.reshape(N, C, H * W)
    mean_r = x2.mean(axis=-1)
    std_r = jnp.std(x2, axis=-1, ddof=1)
    normed_r = (x2 - mean_p) / std_p
    feats_r = jnp.concatenate([mean_r, std_r], axis=1)
    ws_r = _spectral_normalize(w_scale)
    wb_r = _spectral_normalize(w_bias)
    scale_r = feats_r @ ws_r.T + b_scale
    bias_r = feats_r @ wb_r.T + b_bias
    ref = (scale_r[:, :, None] * normed_r + bias_r[:, :, None]).reshape(N, C, H, W)

    assert jnp.allclose(out, ref, atol=1e-4, rtol=1e-4), "mismatch vs reference"
    print("KERNEL_OK")
</pallas_src>

<mosaic_0001>
module attributes {stable_mosaic.version = 11 : i64} {
  func.func @_stats_kernel(%arg0: i32, %arg1: i32, %arg2: memref<8x256xf32, #tpu.memory_space<vmem>>, %arg3: memref<8x1xf32, #tpu.memory_space<vmem>>, %arg4: memref<8x1xf32, #tpu.memory_space<vmem>>, %arg5: memref<8x1xf32, #tpu.memory_space<vmem>>, %arg6: memref<8x1xf32, #tpu.memory_space<vmem>>) attributes {dimension_semantics = [#tpu.dimension_semantics<parallel>, #tpu.dimension_semantics<arbitrary>], iteration_bounds = array<i64: 1, 1>, scalar_prefetch = 0 : i64, scratch_operands = 2 : i64, tpu.core_type = #tpu.core_type<tc>, window_params = [{transform_indices = @transform_0, window_bounds = array<i64: 8, 256>}, {transform_indices = @transform_1, window_bounds = array<i64: 8, 1>}, {transform_indices = @transform_2, window_bounds = array<i64: 8, 1>}]} {
    %c0_i32 = arith.constant 0 : i32
    %0 = arith.cmpi eq, %arg1, %c0_i32 : i32
    %1 = arith.extui %0 : i1 to i32
    %c0_i32_0 = arith.constant 0 : i32
    %2 = arith.cmpi ne, %1, %c0_i32_0 : i32
    scf.if %2 {
      %cst_13 = arith.constant 0.000000e+00 : f32
      %18 = vector.broadcast %cst_13 : f32 to vector<8x1xf32>
      %c0_14 = arith.constant 0 : index
      %c0_15 = arith.constant 0 : index
      %19 = vector.load %arg5[%c0_14, %c0_15] : memref<8x1xf32, #tpu.memory_space<vmem>>, vector<8x1xf32>
      tpu.vector_store %arg5[%c0_14, %c0_15], %18 {strides = array<i32>} : memref<8x1xf32, #tpu.memory_space<vmem>>, vector<8x1xf32>,
      %cst_16 = arith.constant 0.000000e+00 : f32
      %20 = vector.broadcast %cst_16 : f32 to vector<8x1xf32>
      %c0_17 = arith.constant 0 : index
      %c0_18 = arith.constant 0 : index
      %21 = vector.load %arg6[%c0_17, %c0_18] : memref<8x1xf32, #tpu.memory_space<vmem>>, vector<8x1xf32>
      tpu.vector_store %arg6[%c0_17, %c0_18], %20 {strides = array<i32>} : memref<8x1xf32, #tpu.memory_space<vmem>>, vector<8x1xf32>,
    } else {
    }
    %c0 = arith.constant 0 : index
    %c0_1 = arith.constant 0 : index
    %3 = vector.load %arg2[%c0, %c0_1] : memref<8x256xf32, #tpu.memory_space<vmem>>, vector<8x256xf32>
    %c0_2 = arith.constant 0 : index
    %c0_3 = arith.constant 0 : index
    %4 = vector.load %arg5[%c0_2, %c0_3] : memref<8x1xf32, #tpu.memory_space<vmem>>, vector<8x1xf32>
    %cst = arith.constant dense<0.000000e+00> : vector<8xf32>
    %5 = vector.multi_reduction <add>, %3, %cst [1] : vector<8x256xf32> to vector<8xf32>
    %6 = vector.shape_cast %5 : vector<8xf32> to vector<8x1xf32>
    %7 = arith.addf %4, %6 : vector<8x1xf32>
    %c0_4 = arith.constant 0 : index
    %c0_5 = arith.constant 0 : index
    %8 = vector.load %arg5[%c0_4, %c0_5] : memref<8x1xf32, #tpu.memory_space<vmem>>, vector<8x1xf32>
    tpu.vector_store %arg5[%c0_4, %c0_5], %7 {strides = array<i32>} : memref<8x1xf32, #tpu.memory_space<vmem>>, vector<8x1xf32>,
    %c0_6 = arith.constant 0 : index
    %c0_7 = arith.constant 0 : index
    %9 = vector.load %arg6[%c0_6, %c0_7] : memref<8x1xf32, #tpu.memory_space<vmem>>, vector<8x1xf32>
    %10 = arith.mulf %3, %3 : vector<8x256xf32>
    %cst_8 = arith.constant dense<0.000000e+00> : vector<8xf32>
    %11 = vector.multi_reduction <add>, %10, %cst_8 [1] : vector<8x256xf32> to vector<8xf32>
    %12 = vector.shape_cast %11 : vector<8xf32> to vector<8x1xf32>
    %13 = arith.addf %9, %12 : vector<8x1xf32>
    %c0_9 = arith.constant 0 : index
    %c0_10 = arith.constant 0 : index
    %14 = vector.load %arg6[%c0_9, %c0_10] : memref<8x1xf32, #tpu.memory_space<vmem>>, vector<8x1xf32>
    tpu.vector_store %arg6[%c0_9, %c0_10], %13 {strides = array<i32>} : memref<8x1xf32, #tpu.memory_space<vmem>>, vector<8x1xf32>,
    %c0_i32_11 = arith.constant 0 : i32
    %15 = arith.cmpi eq, %arg1, %c0_i32_11 : i32
    %16 = arith.extui %15 : i1 to i32
    %c0_i32_12 = arith.constant 0 : i32
    %17 = arith.cmpi ne, %16, %c0_i32_12 : i32
    scf.if %17 {
      %c0_13 = arith.constant 0 : index
      %c0_14 = arith.constant 0 : index
      %18 = vector.load %arg5[%c0_13, %c0_14] : memref<8x1xf32, #tpu.memory_space<vmem>>, vector<8x1xf32>
      %c0_15 = arith.constant 0 : index
      %c0_16 = arith.constant 0 : index
      %19 = vector.load %arg3[%c0_15, %c0_16] : memref<8x1xf32, #tpu.memory_space<vmem>>, vector<8x1xf32>
      tpu.vector_store %arg3[%c0_15, %c0_16], %18 {strides = array<i32>} : memref<8x1xf32, #tpu.memory_space<vmem>>, vector<8x1xf32>,
      %c0_17 = arith.constant 0 : index
      %c0_18 = arith.constant 0 : index
      %20 = vector.load %arg6[%c0_17, %c0_18] : memref<8x1xf32, #tpu.memory_space<vmem>>, vector<8x1xf32>
      %c0_19 = arith.constant 0 : index
      %c0_20 = arith.constant 0 : index
      %21 = vector.load %arg4[%c0_19, %c0_20] : memref<8x1xf32, #tpu.memory_space<vmem>>, vector<8x1xf32>
      tpu.vector_store %arg4[%c0_19, %c0_20], %20 {strides = array<i32>} : memref<8x1xf32, #tpu.memory_space<vmem>>, vector<8x1xf32>,
    } else {
    }
    return
  }
  func.func @transform_0(%arg0: i32, %arg1: i32) -> (i32, i32) {
    %c0_i32 = arith.constant 0 : i32
    return %arg0, %arg1 : i32, i32
  }
  func.func @transform_1(%arg0: i32, %arg1: i32) -> (i32, i32) {
    %c0_i32 = arith.constant 0 : i32
    %c0_i32_0 = arith.constant 0 : i32
    return %arg0, %c0_i32 : i32, i32
  }
  func.func @transform_2(%arg0: i32, %arg1: i32) -> (i32, i32) {
    %c0_i32 = arith.constant 0 : i32
    %c0_i32_0 = arith.constant 0 : i32
    return %arg0, %c0_i32 : i32, i32
  }
}

</mosaic_0001>

<llo_original>
// kernel: tpu_custom_call.1
$region0: #{tpu_custom_call.1}
  #allocation0 [shape = 'u32[]', space=smem, size = 0x4, offset = 0x4, fixed_abs, tag = 'smem constant byte address 0x4 - core index']
  #allocation1 [shape = 'u32[72,128]{1,0:T(1,128)}', space=vmem, size = 0x9000, scoped, tag = 'internal scratch']
  #allocation2 [shape = 'f32[8,1]{1,0:T(8,128)}', space=vmem, size = 0x1000, scoped, tag = 'scratch operand']
  #allocation3 [shape = 'f32[8,1]{1,0:T(8,128)}', space=vmem, size = 0x1000, scoped, tag = 'scratch operand']
  %s0 = inlined_call_operand.hbm [shape: f32[8,256], index: 0, kind: input, shape index: {}]
  %s1 = inlined_call_operand.vmem [shape: f32[8,1], index: 1, kind: output, shape index: {0}]
  %s2 = inlined_call_operand.vmem [shape: f32[8,1], index: 2, kind: output, shape index: {1}]
  %3 = xla_tuple %s1, %s2
  %s4 = sld [smem:[#allocation0]]
  $region34: #{tpu_custom_call.1} parent=0
    _
  %s6 = ssub.s32 1, %s4
  %s7 = scalar_select 0, %s6, %s4
  $region1: #{tpu_custom_call.1} parent=0
    #allocation4 [shape = 'u8[8192]{0}', space=vmem, size = 0x2000, scoped, tag = 'input window, operand 0, single buffered']
    #allocation5 [shape = 's32[1]{0}', space=sflag, size = 0x4, scoped, tag = 'scoped memory for tpu_custom_call.1']
    %8 = vsyncpa [#allocation5], 0
    // Predicated region
    $region2: #{tpu_custom_call.1} parent=1 // pred_check
      _
    $region3: #{tpu_custom_call.1} parent=1 // pred_check_branch
      %10 = sbr.rel (0) target = $region5
    $region4: #{tpu_custom_call.1} parent=1 // pred_region
      %12 = vsyncadd [#allocation5], 0
      %s14 = sshll.u32 %s0, 4
      %s15 = int_to_ptr.hbm [resolvable:$true] %s14
      %s16 = sshll.u32 [#allocation4], 4
      %s17 = int_to_ptr.vmem [resolvable:$true] %s16
      %19 = dma.hbm_to_vmem [thread:$0]  %s15, 256, %s17, [#allocation5]
    $region5: #{tpu_custom_call.1} parent=1 // pred_fallthru
      _
    // Predicated region
    $region6: #{tpu_custom_call.1} parent=1 // pred_check
      _
    $region7: #{tpu_custom_call.1} parent=1 // pred_check_branch
      %21 = sbr.rel (0) target = $region9
    $region8: #{tpu_custom_call.1} parent=1 // pred_region
      %23 = dma.done [#allocation5], 256
    $region9: #{tpu_custom_call.1} parent=1 // pred_fallthru
      _
    %p24 = scmp.eq.s32.totalorder 0, 0
    // Predicated region
    $region10: #{tpu_custom_call.1} parent=1 // pred_check
      %p25 = pneg %p24
    $region11: #{tpu_custom_call.1} parent=1 // pred_check_branch
      %27 = sbr.rel (%p25) target = $region13
    $region12: #{tpu_custom_call.1} parent=1 // pred_region
      %vm28 = vcmask 7168
      %29 = vst.msk [vmem:[#allocation2] sm:$0xff] %vm28, 0.0
      %30 = vst.msk [vmem:[#allocation3] sm:$0xff] %vm28, 0.0
    $region13: #{tpu_custom_call.1} parent=1 // pred_fallthru
      _
    %v31 = vld [vmem:[#allocation4] sm:$0xff]
    %v32 = vld [vmem:[#allocation4 + $0x8] sm:$0xff]
    %v33 = vld [vmem:[#allocation2] sm:$0xff]
    %v34 = vadd.f32 %v31, %v32
    %35 = vadd.xlane.f32.xlu0 %v34
    %v36 = vpop.xlane.xlu0 %35
    %v37 = vadd.f32 %v33, %v36
    %vm38 = vcmask 7168
    %39 = vst.msk [vmem:[#allocation2] sm:$0xff] %vm38, %v37
    %v40 = vld [vmem:[#allocation3] sm:$0xff]
    %v41 = vmul.f32 %v31, %v31
    %v42 = vmul.f32 %v32, %v32
    %v43 = vadd.f32 %v41, %v42
    %44 = vadd.xlane.f32.xlu0 %v43
    %v45 = vpop.xlane.xlu0 %44
    %v46 = vadd.f32 %v40, %v45
    %47 = vst.msk [vmem:[#allocation3] sm:$0xff] %vm38, %v46
    // Predicated region
    $region14: #{tpu_custom_call.1} parent=1 // pred_check
      %p48 = pneg %p24
    $region15: #{tpu_custom_call.1} parent=1 // pred_check_branch
      %50 = sbr.rel (%p48) target = $region17
    $region16: #{tpu_custom_call.1} parent=1 // pred_region
      %v51 = vld [vmem:[#allocation2] sm:$0xff]
      %52 = vst.msk [vmem:[%s1] sm:$0xff] %vm38, %v51
      %v53 = vld [vmem:[#allocation3] sm:$0xff]
      %54 = vst.msk [vmem:[%s2] sm:$0xff] %vm38, %v53
    $region17: #{tpu_custom_call.1} parent=1 // pred_fallthru
      _
    // Predicated region
    $region18: #{tpu_custom_call.1} parent=1 // pred_check
      _
    $region19: #{tpu_custom_call.1} parent=1 // pred_check_branch
      %56 = sbr.rel (0) target = $region21
    $region20: #{tpu_custom_call.1} parent=1 // pred_region
      _
    $region21: #{tpu_custom_call.1} parent=1 // pred_fallthru
      _
    // Predicated region
    $region22: #{tpu_custom_call.1} parent=1 // pred_check
      _
    $region23: #{tpu_custom_call.1} parent=1 // pred_check_branch
      %58 = sbr.rel (0) target = $region25
    $region24: #{tpu_custom_call.1} parent=1 // pred_region
      _
    $region25: #{tpu_custom_call.1} parent=1 // pred_fallthru
      _
    // Predicated region
    $region26: #{tpu_custom_call.1} parent=1 // pred_check
      _
    $region27: #{tpu_custom_call.1} parent=1 // pred_check_branch
      %60 = sbr.rel (0) target = $region29
    $region28: #{tpu_custom_call.1} parent=1 // pred_region
      _
    $region29: #{tpu_custom_call.1} parent=1 // pred_fallthru
      _
    // Predicated region
    $region30: #{tpu_custom_call.1} parent=1 // pred_check
      _
    $region31: #{tpu_custom_call.1} parent=1 // pred_check_branch
      %62 = sbr.rel (0) target = $region33
    $region32: #{tpu_custom_call.1} parent=1 // pred_region
      _
    $region33: #{tpu_custom_call.1} parent=1 // pred_fallthru
      _
    %63 = vsyncpa [#allocation5], 1

</llo_original>
